<compile_context>
chip_gen: v5e
topology: v5e:2x2
jax: 0.10.0
libtpu: 0.0.40
codegen_flags: <defaults>
</compile_context>

<pallas_src>
import functools

import jax
import jax.numpy as jnp
from jax import lax
from jax.experimental import pallas as pl
from jax.experimental.pallas import tpu as pltpu


def _edge_loss_kernel(xi_ref, xj_ref, a_ref, out_ref):
    # xi_ref: (1, Ti, Daug)   augmented i-side points [-2*x_i, ||x_i||^2, 1]
    # xj_ref: (1, Tj, Daug)   augmented j-side points [x_j, 1, ||x_j||^2]
    # a_ref:  (1, Ti, Tj)     adjacency tile (lane-dense in j)
    # out_ref:(1, 1, 8, 128)  per-(b, i) partial sum, resident across j
    j = pl.program_id(2)

    @pl.when(j == 0)
    def _init():
        out_ref[...] = jnp.zeros_like(out_ref)

    a = a_ref[0].astype(jnp.float32)                     # (Ti, Tj)
    w = a * a                                            # 1 VPU op per A element
    xj = xj_ref[0].astype(jnp.float32)                   # (Tj, Daug)
    xi = xi_ref[0].astype(jnp.float32)                   # (Ti, Daug)

    # Single MXU pass over W:
    #   sum((W @ Xj_aug) * Xi_aug) == sum_ij W_ij * ||x_i - x_j||^2
    wxj = jnp.dot(w, xj,
                  preferred_element_type=jnp.float32,
                  precision=lax.Precision.HIGHEST)       # (Ti, Daug)
    contrib = jnp.sum(wxj * xi)                          # scalar (tiny reduce)

    out_ref[...] += contrib                              # scalar broadcast add


def _round_up(x, m):
    return ((x + m - 1) // m) * m


def _largest_tile(n_pad, cap):
    # Largest multiple of 128 that divides n_pad and is <= cap.
    # n_pad is always a multiple of 128, so this terminates at >= 128.
    t = min(cap, n_pad)
    t -= t % 128
    while n_pad % t:
        t -= 128
    return t


@functools.partial(jax.jit, static_argnames=("tile_i", "tile_j"))
def edge_loss(pred, A, *, tile_i=None, tile_j=None):
    """pred: (B, N, D), A: (B, N, N)  ->  scalar float32 loss."""
    B, N, D = pred.shape
    assert A.shape == (B, N, N)

    x = pred.astype(jnp.float32)
    a = A.astype(jnp.float32)

    # Zero-pad N up to a multiple of 128: padded A rows/cols are zero, so they
    # contribute exactly 0 to the loss (avoids any full-N fallback block).
    n_pad = max(_round_up(N, 128), 128)
    if n_pad != N:
        x = jnp.pad(x, ((0, 0), (0, n_pad - N), (0, 0)))
        a = jnp.pad(a, ((0, 0), (0, n_pad - N), (0, n_pad - N)))

    # Precompute squared norms once (hoisted out of the (i, j) loop) and fold
    # them into augmented point arrays so one matmul does the full reduction.
    s = jnp.sum(x * x, axis=-1, keepdims=True)            # (B, n_pad, 1)
    ones = jnp.ones_like(s)
    xi_aug = jnp.concatenate([-2.0 * x, s, ones], axis=-1)  # (B, n_pad, D+2)
    xj_aug = jnp.concatenate([x, ones, s], axis=-1)          # (B, n_pad, D+2)
    daug = D + 2

    if tile_i is None:
        tile_i = _largest_tile(n_pad, 512)
    if tile_j is None:
        tile_j = _largest_tile(n_pad, 2048)
    assert n_pad % tile_i == 0 and n_pad % tile_j == 0
    assert tile_i % 128 == 0 and tile_j % 128 == 0
    n_i = n_pad // tile_i
    n_j = n_pad // tile_j

    partial = pl.pallas_call(
        _edge_loss_kernel,
        out_shape=jax.ShapeDtypeStruct((B, n_i, 8, 128), jnp.float32),
        grid_spec=pltpu.PrefetchScalarGridSpec(
            num_scalar_prefetch=0,
            grid=(B, n_i, n_j),
            in_specs=[
                pl.BlockSpec((1, tile_i, daug), lambda b, i, j: (b, i, 0)),
                pl.BlockSpec((1, tile_j, daug), lambda b, i, j: (b, j, 0)),
                pl.BlockSpec((1, tile_i, tile_j), lambda b, i, j: (b, i, j)),
            ],
            out_specs=pl.BlockSpec((1, 1, 8, 128), lambda b, i, j: (b, i, 0, 0)),
        ),
        compiler_params=pltpu.CompilerParams(
            # b and i index independent output blocks -> megacore-parallel;
            # j is the reduction axis for the resident output block.
            dimension_semantics=("parallel", "parallel", "arbitrary"),
        ),
    )(xi_aug, xj_aug, a)

    # Every element of a (1,1,8,128) block holds the same per-(b,i) partial.
    return jnp.sum(partial[:, :, 0, 0])


def edge_loss_ref(pred, A):
    # Pure-JAX reference mirroring the PyTorch module (direct formulation).
    diff = pred[:, :, None, :] - pred[:, None, :, :]      # (B, N, N, D): x_i - x_j
    e = diff * A[:, :, :, None]
    return jnp.sum(e * e)


if __name__ == "__main__":
    key = jax.random.PRNGKey(0)
    k1, k2, k3, k4, k5, k6 = jax.random.split(key, 6)

    # Small shapes consistent with the module: pred (B, num_points, points_dim).
    B, N, D = 2, 16, 8
    pred = jax.random.normal(k1, (B, N, D), dtype=jnp.float32)
    A = jax.random.uniform(k2, (B, N, N), dtype=jnp.float32)
    loss = jax.block_until_ready(edge_loss(pred, A))
    loss_ref = jax.block_until_ready(edge_loss_ref(pred, A))
    assert jnp.allclose(loss, loss_ref, rtol=1e-4, atol=1e-4), (loss, loss_ref)

    # Exercise the tiled reduction / per-(b,i) partial path: grid = (2, 2, 2).
    B2, N2, D2 = 2, 256, 16
    pred2 = jax.random.normal(k3, (B2, N2, D2), dtype=jnp.float32)
    A2 = jax.random.uniform(k4, (B2, N2, N2), dtype=jnp.float32)
    loss2 = jax.block_until_ready(edge_loss(pred2, A2, tile_i=128, tile_j=128))
    loss2_ref = jax.block_until_ready(edge_loss_ref(pred2, A2))
    assert jnp.allclose(loss2, loss2_ref, rtol=1e-4), (loss2, loss2_ref)

    # N not divisible by 128 -> zero-padded path, B = 1.
    B3, N3, D3 = 1, 100, 4
    pred3 = jax.random.normal(k5, (B3, N3, D3), dtype=jnp.float32)
    A3 = jax.random.uniform(k6, (B3, N3, N3), dtype=jnp.float32)
    loss3 = jax.block_until_ready(edge_loss(pred3, A3))
    loss3_ref = jax.block_until_ready(edge_loss_ref(pred3, A3))
    assert jnp.allclose(loss3, loss3_ref, rtol=1e-4, atol=1e-4), (loss3, loss3_ref)

    print("KERNEL_OK")
</pallas_src>

<mosaic_0001>
module attributes {stable_mosaic.version = 11 : i64} {
  func.func @_edge_loss_kernel(%arg0: i32, %arg1: i32, %arg2: i32, %arg3: memref<1x128x10xf32, #tpu.memory_space<vmem>>, %arg4: memref<1x128x10xf32, #tpu.memory_space<vmem>>, %arg5: memref<1x128x128xf32, #tpu.memory_space<vmem>>, %arg6: memref<1x1x8x128xf32, #tpu.memory_space<vmem>>) attributes {dimension_semantics = [#tpu.dimension_semantics<parallel>, #tpu.dimension_semantics<parallel>, #tpu.dimension_semantics<arbitrary>], iteration_bounds = array<i64: 2, 1, 1>, scalar_prefetch = 0 : i64, scratch_operands = 0 : i64, tpu.core_type = #tpu.core_type<tc>, window_params = [{transform_indices = @transform_0, window_bounds = array<i64: 1, 128, 10>}, {transform_indices = @transform_1, window_bounds = array<i64: 1, 128, 10>}, {transform_indices = @transform_2, window_bounds = array<i64: 1, 128, 128>}, {transform_indices = @transform_3, window_bounds = array<i64: 1, 1, 8, 128>}]} {
    %c0_i32 = arith.constant 0 : i32
    %0 = arith.cmpi eq, %arg2, %c0_i32 : i32
    %1 = arith.extui %0 : i1 to i32
    %c0_i32_0 = arith.constant 0 : i32
    %2 = arith.cmpi ne, %1, %c0_i32_0 : i32
    scf.if %2 {
      %cst_18 = arith.constant 0.000000e+00 : f32
      %20 = vector.broadcast %cst_18 : f32 to vector<1x1x8x128xf32>
      %c0_19 = arith.constant 0 : index
      %c0_20 = arith.constant 0 : index
      %c0_21 = arith.constant 0 : index
      %c0_22 = arith.constant 0 : index
      %21 = vector.load %arg6[%c0_19, %c0_20, %c0_21, %c0_22] : memref<1x1x8x128xf32, #tpu.memory_space<vmem>>, vector<1x1x8x128xf32>
      tpu.vector_store %arg6[%c0_19, %c0_20, %c0_21, %c0_22], %20 {strides = array<i32>} : memref<1x1x8x128xf32, #tpu.memory_space<vmem>>, vector<1x1x8x128xf32>,
    } else {
    }
    %c0 = arith.constant 0 : index
    %c0_1 = arith.constant 0 : index
    %c0_2 = arith.constant 0 : index
    %3 = vector.load %arg5[%c0, %c0_1, %c0_2] : memref<1x128x128xf32, #tpu.memory_space<vmem>>, vector<1x128x128xf32>
    %4 = vector.shape_cast %3 : vector<1x128x128xf32> to vector<128x128xf32>
    %5 = arith.mulf %4, %4 : vector<128x128xf32>
    %c0_3 = arith.constant 0 : index
    %c0_4 = arith.constant 0 : index
    %c0_5 = arith.constant 0 : index
    %6 = vector.load %arg4[%c0_3, %c0_4, %c0_5] : memref<1x128x10xf32, #tpu.memory_space<vmem>>, vector<1x128x10xf32>
    %7 = vector.shape_cast %6 : vector<1x128x10xf32> to vector<128x10xf32>
    %c0_6 = arith.constant 0 : index
    %c0_7 = arith.constant 0 : index
    %c0_8 = arith.constant 0 : index
    %8 = vector.load %arg3[%c0_6, %c0_7, %c0_8] : memref<1x128x10xf32, #tpu.memory_space<vmem>>, vector<1x128x10xf32>
    %9 = vector.shape_cast %8 : vector<1x128x10xf32> to vector<128x10xf32>
    %cst = arith.constant dense<0.000000e+00> : vector<128x10xf32>
    %10 = tpu.matmul %5, %7, %cst {dimension_numbers = #tpu.dot_dimension_numbers<[1], [0], [0], [1], [0, 0, 1, 1], [], []>, precision = #tpu.contract_precision<fp32>} : vector<128x128xf32>, vector<128x10xf32>, vector<128x10xf32> -> vector<128x10xf32>
    %11 = arith.mulf %10, %9 : vector<128x10xf32>
    %12 = vector.shape_cast %11 : vector<128x10xf32> to vector<1x128x10xf32>
    %cst_9 = arith.constant dense<0.000000e+00> : vector<1xf32>
    %13 = vector.multi_reduction <add>, %12, %cst_9 [1, 2] : vector<1x128x10xf32> to vector<1xf32>
    %14 = vector.shape_cast %13 : vector<1xf32> to vector<1x1x1xf32>
    %15 = vector.extract %14[0, 0, 0] : f32 from vector<1x1x1xf32>
    %c0_10 = arith.constant 0 : index
    %c0_11 = arith.constant 0 : index
    %c0_12 = arith.constant 0 : index
    %c0_13 = arith.constant 0 : index
    %16 = vector.load %arg6[%c0_10, %c0_11, %c0_12, %c0_13] : memref<1x1x8x128xf32, #tpu.memory_space<vmem>>, vector<1x1x8x128xf32>
    %17 = vector.broadcast %15 : f32 to vector<1x1x8x128xf32>
    %18 = arith.addf %16, %17 : vector<1x1x8x128xf32>
    %c0_14 = arith.constant 0 : index
    %c0_15 = arith.constant 0 : index
    %c0_16 = arith.constant 0 : index
    %c0_17 = arith.constant 0 : index
    %19 = vector.load %arg6[%c0_14, %c0_15, %c0_16, %c0_17] : memref<1x1x8x128xf32, #tpu.memory_space<vmem>>, vector<1x1x8x128xf32>
    tpu.vector_store %arg6[%c0_14, %c0_15, %c0_16, %c0_17], %18 {strides = array<i32>} : memref<1x1x8x128xf32, #tpu.memory_space<vmem>>, vector<1x1x8x128xf32>,
    return
  }
  func.func @transform_0(%arg0: i32, %arg1: i32, %arg2: i32) -> (i32, i32, i32) {
    %c0_i32 = arith.constant 0 : i32
    %c0_i32_0 = arith.constant 0 : i32
    return %arg0, %arg1, %c0_i32 : i32, i32, i32
  }
  func.func @transform_1(%arg0: i32, %arg1: i32, %arg2: i32) -> (i32, i32, i32) {
    %c0_i32 = arith.constant 0 : i32
    %c0_i32_0 = arith.constant 0 : i32
    return %arg0, %arg2, %c0_i32 : i32, i32, i32
  }
  func.func @transform_2(%arg0: i32, %arg1: i32, %arg2: i32) -> (i32, i32, i32) {
    %c0_i32 = arith.constant 0 : i32
    return %arg0, %arg1, %arg2 : i32, i32, i32
  }
  func.func @transform_3(%arg0: i32, %arg1: i32, %arg2: i32) -> (i32, i32, i32, i32) {
    %c0_i32 = arith.constant 0 : i32
    %c0_i32_0 = arith.constant 0 : i32
    %c0_i32_1 = arith.constant 0 : i32
    return %arg0, %arg1, %c0_i32, %c0_i32_0 : i32, i32, i32, i32
  }
}

</mosaic_0001>

<llo_original>
// kernel: edge_loss.1
$region0: #{edge_loss.1}
  #allocation0 [shape = 'u32[]', space=smem, size = 0x4, offset = 0x4, fixed_abs, tag = 'smem constant byte address 0x4 - core index']
  #allocation1 [shape = 'u32[72,128]{1,0:T(1,128)}', space=vmem, size = 0x9000, scoped, tag = 'internal scratch']
  %s0 = inlined_call_operand.vmem [shape: f32[2,128,10], index: 0, kind: input, shape index: {}]
  %s1 = inlined_call_operand.vmem [shape: f32[2,128,10], index: 1, kind: input, shape index: {}]
  %s2 = inlined_call_operand.vmem [shape: f32[2,128,128], index: 2, kind: input, shape index: {}]
  %s3 = inlined_call_operand.vmem [shape: f32[2,1,8,128], index: 3, kind: output, shape index: {}]
  %s4 = sld [smem:[#allocation0]]
  $region49: #{edge_loss.1} parent=0
    _
  %s6 = ssub.s32 1, %s4
  %s7 = scalar_select 0, %s6, %s4
  loop: start=0, step=1, limit=4
  $region2: #{edge_loss.1} parent=0 // loop_pre_header
    _
  $region3: #{edge_loss.1} parent=0 // loop_header
    %s9 = sphi 0, %s13
    %p10 = scmp.ge.s32.totalorder %s9, 4
    %s16 = sphi 0, %s35
    %s17 = sphi 0, %s31
    %s18 = sphi 0, %s27
    %s19 = sphi 0, %s16
    %s20 = sphi 0, %s17
    %s21 = sphi 0, %s18
    %s22 = sphi 0, %s19
    %s23 = sphi 0, %s20
    %s24 = sphi 0, %s21
    %s40 = sphi 0, %s42
    %s43 = sphi 0, %s40
    %s44 = sphi 0, %s43
    %s60 = sphi 0, %s44
    %s68 = sphi 0, %s70
    %s71 = sphi 0, %s68
    %s72 = sphi 0, %s71
    %s88 = sphi 0, %s72
    %s98 = sphi 0, %s100
    %s101 = sphi 0, %s98
    %s102 = sphi 0, %s101
    %s118 = sphi 0, %s102
    %s126 = sphi 0, %s128
    %s129 = sphi 0, %s126
    %s130 = sphi 0, %s129
    %s146 = sphi 0, %s130
  $region4: #{edge_loss.1} parent=0 // loop_header_branch
    %12 = sbr.rel (%p10) target = $region8
  $region5: #{edge_loss.1} parent=0 // loop_body
    %s14 = ssub.s32 %s9, 1
    %s15 = ssub.s32 %s9, 2
    %s25 = sadd.s32 1, %s18
    %p26 = scmp.ge.s32.totalorder %s25, 1
    %s27 = scalar_select %p26, 0, %s25
    %s28 = sadd.s32 1, %s17
    %s29 = scalar_select %p26, %s28, %s17
    %p30 = scmp.ge.s32.totalorder %s29, 1
    %s31 = scalar_select %p30, 0, %s29
    %s32 = sadd.s32 1, %s16
    %s33 = scalar_select %p30, %s32, %s16
    %p34 = scmp.ge.s32.totalorder %s33, 2
    %s35 = scalar_select %p34, 0, %s33
    %s36 = ssub.s32 %s16, %s35
    %s37 = ssub.s32 %s17, %s31
    %s38 = sor.u32 %s36, %s37
    %p39 = scmp.eq.s32.totalorder %s38, 0
    %s41 = sadd.s32 %s40, 1
    %s42 = scalar_select %p39, %s40, %s41
    %p45 = pneg %p39
    %p46 = scmp.eq.s32.totalorder %s9, 1
    %p47 = por %p45, %p46
    %p48 = scmp.ne.s32.totalorder %s40, %s43
    %p49 = scmp.eq.s32.totalorder %s9, 0
    %p50 = por %p48, %p49
    %p51 = scmp.ne.s32.totalorder %s40, %s43
    %p52 = scmp.eq.s32.totalorder %s14, 1
    %p53 = por %p51, %p52
    %p54 = scmp.ne.s32.totalorder %s43, %s44
    %p55 = scmp.eq.s32.totalorder %s14, 0
    %p56 = por %p54, %p55
    %p57 = scmp.ne.s32.totalorder %s43, %s44
    %p58 = scmp.eq.s32.totalorder %s15, 1
    %p59 = por %p57, %p58
    %p61 = scmp.ne.s32.totalorder %s44, %s60
    %p62 = scmp.eq.s32.totalorder %s15, 0
    %p63 = por %p61, %p62
    %s64 = ssub.s32 %s16, %s35
    %s65 = ssub.s32 %s18, %s27
    %s66 = sor.u32 %s64, %s65
    %p67 = scmp.eq.s32.totalorder %s66, 0
    %s69 = sadd.s32 %s68, 1
    %s70 = scalar_select %p67, %s68, %s69
    %p73 = pneg %p67
    %p74 = scmp.eq.s32.totalorder %s9, 1
    %p75 = por %p73, %p74
    %p76 = scmp.ne.s32.totalorder %s68, %s71
    %p77 = scmp.eq.s32.totalorder %s9, 0
    %p78 = por %p76, %p77
    %p79 = scmp.ne.s32.totalorder %s68, %s71
    %p80 = scmp.eq.s32.totalorder %s14, 1
    %p81 = por %p79, %p80
    %p82 = scmp.ne.s32.totalorder %s71, %s72
    %p83 = scmp.eq.s32.totalorder %s14, 0
    %p84 = por %p82, %p83
    %p85 = scmp.ne.s32.totalorder %s71, %s72
    %p86 = scmp.eq.s32.totalorder %s15, 1
    %p87 = por %p85, %p86
    %p89 = scmp.ne.s32.totalorder %s72, %s88
    %p90 = scmp.eq.s32.totalorder %s15, 0
    %p91 = por %p89, %p90
    %s92 = ssub.s32 %s16, %s35
    %s93 = ssub.s32 %s17, %s31
    %s94 = sor.u32 %s92, %s93
    %s95 = ssub.s32 %s18, %s27
    %s96 = sor.u32 %s94, %s95
    %p97 = scmp.eq.s32.totalorder %s96, 0
    %s99 = sadd.s32 %s98, 1
    %s100 = scalar_select %p97, %s98, %s99
    %p103 = pneg %p97
    %p104 = scmp.eq.s32.totalorder %s9, 1
    %p105 = por %p103, %p104
    %p106 = scmp.ne.s32.totalorder %s98, %s101
    %p107 = scmp.eq.s32.totalorder %s9, 0
    %p108 = por %p106, %p107
    %p109 = scmp.ne.s32.totalorder %s98, %s101
    %p110 = scmp.eq.s32.totalorder %s14, 1
    %p111 = por %p109, %p110
    %p112 = scmp.ne.s32.totalorder %s101, %s102
    %p113 = scmp.eq.s32.totalorder %s14, 0
    %p114 = por %p112, %p113
    %p115 = scmp.ne.s32.totalorder %s101, %s102
    %p116 = scmp.eq.s32.totalorder %s15, 1
    %p117 = por %p115, %p116
    %p119 = scmp.ne.s32.totalorder %s102, %s118
    %p120 = scmp.eq.s32.totalorder %s15, 0
    %p121 = por %p119, %p120
    %s122 = ssub.s32 %s16, %s35
    %s123 = ssub.s32 %s17, %s31
    %s124 = sor.u32 %s122, %s123
    %p125 = scmp.eq.s32.totalorder %s124, 0
    %s127 = sadd.s32 %s126, 1
    %s128 = scalar_select %p125, %s126, %s127
    %p131 = pneg %p125
    %p132 = scmp.eq.s32.totalorder %s9, 1
    %p133 = por %p131, %p132
    %p134 = scmp.ne.s32.totalorder %s126, %s129
    %p135 = scmp.eq.s32.totalorder %s9, 0
    %p136 = por %p134, %p135
    %p137 = scmp.ne.s32.totalorder %s126, %s129
    %p138 = scmp.eq.s32.totalorder %s14, 1
    %p139 = por %p137, %p138
    %p140 = scmp.ne.s32.totalorder %s129, %s130
    %p141 = scmp.eq.s32.totalorder %s14, 0
    %p142 = por %p140, %p141
    %p143 = scmp.ne.s32.totalorder %s129, %s130
    %p144 = scmp.eq.s32.totalorder %s15, 1
    %p145 = por %p143, %p144
    %p147 = scmp.ne.s32.totalorder %s130, %s146
    %p148 = scmp.eq.s32.totalorder %s15, 0
    %p149 = por %p147, %p148
    %p150 = scmp.le.s32.totalorder 1, %s9
    %p151 = scmp.lt.s32.totalorder %s9, 3
    %p152 = pnand %p150, %p151
    %p153 = pneg %p152
    // Predicated region
    $region9: #{edge_loss.1} parent=5 // pred_check
      _
    $region10: #{edge_loss.1} parent=5 // pred_check_branch
      %155 = sbr.rel (%p152) target = $region12
    $region11: #{edge_loss.1} parent=5 // pred_region
      %s156 = ssub.s32 %s9, 1
    $region12: #{edge_loss.1} parent=5 // pred_fallthru
      _
    %p157 = scmp.lt.s32.totalorder %s9, 2
    // Predicated region
    $region13: #{edge_loss.1} parent=5 // pred_check
      %p158 = pneg %p157
    $region14: #{edge_loss.1} parent=5 // pred_check_branch
      %160 = sbr.rel (%p158) target = $region16
    $region15: #{edge_loss.1} parent=5 // pred_region
      // Predicated region
      $region17: #{edge_loss.1} parent=15 // pred_check
        %p161 = pneg %p50
      $region18: #{edge_loss.1} parent=15 // pred_check_branch
        %163 = sbr.rel (%p161) target = $region20
      $region19: #{edge_loss.1} parent=15 // pred_region
        %s164 = smul.u32 16, %s17
        %p165 = scmp.lt.s32.totalorder %s16, 1
        %s166 = scalar_select %p165, %s16, 1
        %p167 = scmp.lt.s32.totalorder %s164, 15
        %s168 = scalar_select %p167, %s164, 15
        %s169 = smul.addr %s166, 16
        %s170 = sadd.s32 %s168, %s169
        %s171 = smul.addr %s170, 8
        %s172 = scalar_lea.vmem %s0, %s171
        %s173 = smul.u32 16, %s17
      $region20: #{edge_loss.1} parent=15 // pred_fallthru
        _
      // Predicated region
      $region21: #{edge_loss.1} parent=15 // pred_check
        %p174 = pneg %p78
      $region22: #{edge_loss.1} parent=15 // pred_check_branch
        %176 = sbr.rel (%p174) target = $region24
      $region23: #{edge_loss.1} parent=15 // pred_region
        %s177 = smul.u32 16, %s18
        %p178 = scmp.lt.s32.totalorder %s16, 1
        %s179 = scalar_select %p178, %s16, 1
        %p180 = scmp.lt.s32.totalorder %s177, 15
        %s181 = scalar_select %p180, %s177, 15
        %s182 = smul.addr %s179, 16
        %s183 = sadd.s32 %s181, %s182
        %s184 = smul.addr %s183, 8
        %s185 = scalar_lea.vmem %s1, %s184
        %s186 = smul.u32 16, %s18
      $region24: #{edge_loss.1} parent=15 // pred_fallthru
        _
      // Predicated region
      $region25: #{edge_loss.1} parent=15 // pred_check
        %p187 = pneg %p108
      $region26: #{edge_loss.1} parent=15 // pred_check_branch
        %189 = sbr.rel (%p187) target = $region28
      $region27: #{edge_loss.1} parent=15 // pred_region
        %s190 = smul.u32 16, %s17
        %p191 = scmp.lt.s32.totalorder %s16, 1
        %s192 = scalar_select %p191, %s16, 1
        %p193 = scmp.lt.s32.totalorder %s190, 15
        %s194 = scalar_select %p193, %s190, 15
        %p195 = scmp.lt.s32.totalorder %s18, 0
        %s196 = scalar_select %p195, %s18, 0
        %s197 = sadd.s32 %s196, %s194
        %s198 = smul.addr %s192, 16
        %s199 = sadd.s32 %s197, %s198
        %s200 = smul.addr %s199, 8
        %s201 = scalar_lea.vmem %s2, %s200
        %s202 = smul.u32 16, %s17
      $region28: #{edge_loss.1} parent=15 // pred_fallthru
        _
    $region16: #{edge_loss.1} parent=5 // pred_fallthru
      _
    %p203 = scmp.le.s32.totalorder 1, %s9
    %p204 = scmp.lt.s32.totalorder %s9, 3
    %p205 = pnand %p203, %p204
    %p206 = pneg %p205
    // Predicated region
    $region29: #{edge_loss.1} parent=5 // pred_check
      _
    $region30: #{edge_loss.1} parent=5 // pred_check_branch
      %208 = sbr.rel (%p205) target = $region32
    $region31: #{edge_loss.1} parent=5 // pred_region
      %s209 = ssub.s32 %s9, 1
      %s210 = smul.u32 16, %s20
      %p211 = scmp.lt.s32.totalorder %s19, 1
      %s212 = scalar_select %p211, %s19, 1
      %p213 = scmp.lt.s32.totalorder %s210, 15
      %s214 = scalar_select %p213, %s210, 15
      %s215 = smul.addr %s212, 16
      %s216 = sadd.s32 %s214, %s215
      %s217 = smul.addr %s216, 8
      %s218 = scalar_lea.vmem %s0, %s217
      %p219 = pneg %p56
      %p220 = pneg %p53
      %s221 = smul.u32 16, %s21
      %p222 = scmp.lt.s32.totalorder %s19, 1
      %s223 = scalar_select %p222, %s19, 1
      %p224 = scmp.lt.s32.totalorder %s221, 15
      %s225 = scalar_select %p224, %s221, 15
      %s226 = smul.addr %s223, 16
      %s227 = sadd.s32 %s225, %s226
      %s228 = smul.addr %s227, 8
      %s229 = scalar_lea.vmem %s1, %s228
      %p230 = pneg %p84
      %p231 = pneg %p81
      %s232 = smul.u32 16, %s20
      %p233 = scmp.lt.s32.totalorder %s19, 1
      %s234 = scalar_select %p233, %s19, 1
      %p235 = scmp.lt.s32.totalorder %s232, 15
      %s236 = scalar_select %p235, %s232, 15
      %p237 = scmp.lt.s32.totalorder %s21, 0
      %s238 = scalar_select %p237, %s21, 0
      %s239 = sadd.s32 %s238, %s236
      %s240 = smul.addr %s234, 16
      %s241 = sadd.s32 %s239, %s240
      %s242 = smul.addr %s241, 8
      %s243 = scalar_lea.vmem %s2, %s242
      %p244 = pneg %p114
      %p245 = pneg %p111
      %p246 = pneg %p142
      %p247 = pneg %p139
      %p248 = scmp.lt.s32.totalorder %s19, 1
      %s249 = scalar_select %p248, %s19, 1
      %p250 = scmp.lt.s32.totalorder %s20, 0
      %s251 = scalar_select %p250, %s20, 0
      %s252 = sadd.s32 %s251, %s249
      %s253 = smul.addr %s252, 8
      %s254 = scalar_lea.vmem %s3, %s253
      %s255 = smul.u32 16, %s20
      %p256 = scmp.lt.s32.totalorder %s19, 1
      %s257 = scalar_select %p256, %s19, 1
      %p258 = scmp.lt.s32.totalorder %s255, 15
      %s259 = scalar_select %p258, %s255, 15
      %s260 = smul.addr %s257, 16
      %s261 = sadd.s32 %s259, %s260
      %s262 = smul.addr %s261, 8
      %s263 = scalar_lea.vmem %s0, %s262
      %s264 = smul.u32 16, %s20
      %s265 = smul.u32 16, %s21
      %p266 = scmp.lt.s32.totalorder %s19, 1
      %s267 = scalar_select %p266, %s19, 1
      %p268 = scmp.lt.s32.totalorder %s265, 15
      %s269 = scalar_select %p268, %s265, 15
      %s270 = smul.addr %s267, 16
      %s271 = sadd.s32 %s269, %s270
      %s272 = smul.addr %s271, 8
      %s273 = scalar_lea.vmem %s1, %s272
      %s274 = smul.u32 16, %s21
      %s275 = smul.u32 16, %s20
      %p276 = scmp.lt.s32.totalorder %s19, 1
      %s277 = scalar_select %p276, %s19, 1
      %p278 = scmp.lt.s32.totalorder %s275, 15
      %s279 = scalar_select %p278, %s275, 15
      %p280 = scmp.lt.s32.totalorder %s21, 0
      %s281 = scalar_select %p280, %s21, 0
      %s282 = sadd.s32 %s281, %s279
      %s283 = smul.addr %s277, 16
      %s284 = sadd.s32 %s282, %s283
      %s285 = smul.addr %s284, 8
      %s286 = scalar_lea.vmem %s2, %s285
      %s287 = smul.u32 16, %s20
      %p288 = scmp.lt.s32.totalorder %s19, 1
      %s289 = scalar_select %p288, %s19, 1
      %p290 = scmp.lt.s32.totalorder %s20, 0
      %s291 = scalar_select %p290, %s20, 0
      %s292 = sadd.s32 %s291, %s289
      %s293 = smul.addr %s292, 8
      %s294 = scalar_lea.vmem %s3, %s293
      %p295 = scmp.eq.s32.totalorder %s21, 0
      // Predicated region
      $region33: #{edge_loss.1} parent=31 // pred_check
        %p296 = pneg %p295
      $region34: #{edge_loss.1} parent=31 // pred_check_branch
        %298 = sbr.rel (%p296) target = $region36
      $region35: #{edge_loss.1} parent=31 // pred_region
        %299 = vst [vmem:[%s294] sm:$0xff] 0.0
      $region36: #{edge_loss.1} parent=31 // pred_fallthru
        _
      %v300 = vld [vmem:[%s286] sm:$0xff]
      %v301 = vld [vmem:[%s286 + $0x8] sm:$0xff]
      %v302 = vld [vmem:[%s286 + $0x10] sm:$0xff]
      %v303 = vld [vmem:[%s286 + $0x18] sm:$0xff]
      %v304 = vld [vmem:[%s286 + $0x20] sm:$0xff]
      %v305 = vld [vmem:[%s286 + $0x28] sm:$0xff]
      %v306 = vld [vmem:[%s286 + $0x30] sm:$0xff]
      %v307 = vld [vmem:[%s286 + $0x38] sm:$0xff]
      %v308 = vld [vmem:[%s286 + $0x40] sm:$0xff]
      %v309 = vld [vmem:[%s286 + $0x48] sm:$0xff]
      %v310 = vld [vmem:[%s286 + $0x50] sm:$0xff]
      %v311 = vld [vmem:[%s286 + $0x58] sm:$0xff]
      %v312 = vld [vmem:[%s286 + $0x60] sm:$0xff]
      %v313 = vld [vmem:[%s286 + $0x68] sm:$0xff]
      %v314 = vld [vmem:[%s286 + $0x70] sm:$0xff]
      %v315 = vld [vmem:[%s286 + $0x78] sm:$0xff]
      %v316 = vmul.f32 %v300, %v300
      %v317 = vmul.f32 %v301, %v301
      %v318 = vmul.f32 %v302, %v302
      %v319 = vmul.f32 %v303, %v303
      %v320 = vmul.f32 %v304, %v304
      %v321 = vmul.f32 %v305, %v305
      %v322 = vmul.f32 %v306, %v306
      %v323 = vmul.f32 %v307, %v307
      %v324 = vmul.f32 %v308, %v308
      %v325 = vmul.f32 %v309, %v309
      %v326 = vmul.f32 %v310, %v310
      %v327 = vmul.f32 %v311, %v311
      %v328 = vmul.f32 %v312, %v312
      %v329 = vmul.f32 %v313, %v313
      %v330 = vmul.f32 %v314, %v314
      %v331 = vmul.f32 %v315, %v315
      %v332 = vld [vmem:[%s273] sm:$0xff]
      %v333 = vld [vmem:[%s273 + $0x8] sm:$0xff]
      %v334 = vld [vmem:[%s273 + $0x10] sm:$0xff]
      %v335 = vld [vmem:[%s273 + $0x18] sm:$0xff]
      %v336 = vld [vmem:[%s273 + $0x20] sm:$0xff]
      %v337 = vld [vmem:[%s273 + $0x28] sm:$0xff]
      %v338 = vld [vmem:[%s273 + $0x30] sm:$0xff]
      %v339 = vld [vmem:[%s273 + $0x38] sm:$0xff]
      %v340 = vld [vmem:[%s273 + $0x40] sm:$0xff]
      %v341 = vld [vmem:[%s273 + $0x48] sm:$0xff]
      %v342 = vld [vmem:[%s273 + $0x50] sm:$0xff]
      %v343 = vld [vmem:[%s273 + $0x58] sm:$0xff]
      %v344 = vld [vmem:[%s273 + $0x60] sm:$0xff]
      %v345 = vld [vmem:[%s273 + $0x68] sm:$0xff]
      %v346 = vld [vmem:[%s273 + $0x70] sm:$0xff]
      %v347 = vld [vmem:[%s273 + $0x78] sm:$0xff]
      %v348 = vld [vmem:[%s263] sm:$0xff]
      %v349 = vld [vmem:[%s263 + $0x8] sm:$0xff]
      %v350 = vld [vmem:[%s263 + $0x10] sm:$0xff]
      %v351 = vld [vmem:[%s263 + $0x18] sm:$0xff]
      %v352 = vld [vmem:[%s263 + $0x20] sm:$0xff]
      %v353 = vld [vmem:[%s263 + $0x28] sm:$0xff]
      %v354 = vld [vmem:[%s263 + $0x30] sm:$0xff]
      %v355 = vld [vmem:[%s263 + $0x38] sm:$0xff]
      %v356 = vld [vmem:[%s263 + $0x40] sm:$0xff]
      %v357 = vld [vmem:[%s263 + $0x48] sm:$0xff]
      %v358 = vld [vmem:[%s263 + $0x50] sm:$0xff]
      %v359 = vld [vmem:[%s263 + $0x58] sm:$0xff]
      %v360 = vld [vmem:[%s263 + $0x60] sm:$0xff]
      %v361 = vld [vmem:[%s263 + $0x68] sm:$0xff]
      %v362 = vld [vmem:[%s263 + $0x70] sm:$0xff]
      %v363 = vld [vmem:[%s263 + $0x78] sm:$0xff]
      %v364 = vand.u32 %v347, 4294901760
      %365 = vmatpush.msra.mxu0 %v364
      %v366 = vand.u32 %v346, 4294901760
      %367 = vmatpush.msra.mxu0 %v366
      %v368 = vand.u32 %v345, 4294901760
      %369 = vmatpush.msra.mxu0 %v368
      %v370 = vand.u32 %v344, 4294901760
      %371 = vmatpush.msra.mxu0 %v370
      %v372 = vand.u32 %v343, 4294901760
      %373 = vmatpush.msra.mxu0 %v372
      %v374 = vand.u32 %v342, 4294901760
      %375 = vmatpush.msra.mxu0 %v374
      %v376 = vand.u32 %v341, 4294901760
      %377 = vmatpush.msra.mxu0 %v376
      %v378 = vand.u32 %v340, 4294901760
      %379 = vmatpush.msra.mxu0 %v378
      %v380 = vand.u32 %v339, 4294901760
      %381 = vmatpush.msra.mxu0 %v380
      %v382 = vand.u32 %v338, 4294901760
      %383 = vmatpush.msra.mxu0 %v382
      %v384 = vand.u32 %v337, 4294901760
      %385 = vmatpush.msra.mxu0 %v384
      %v386 = vand.u32 %v336, 4294901760
      %387 = vmatpush.msra.mxu0 %v386
      %v388 = vand.u32 %v335, 4294901760
      %389 = vmatpush.msra.mxu0 %v388
      %v390 = vand.u32 %v334, 4294901760
      %391 = vmatpush.msra.mxu0 %v390
      %v392 = vand.u32 %v333, 4294901760
      %393 = vmatpush.msra.mxu0 %v392
      %v394 = vand.u32 %v332, 4294901760
      %395 = vmatpush.msra.mxu0 %v394
      %v396 = vand.u32 %v316, 4294901760
      %v397 = vsub.f32 %v316, %v396
      %v398 = vand.u32 %v397, 4294901760
      %v399 = vsub.f32 %v397, %v398
      %v400 = vand.u32 %v399, 4294901760
      %401 = vmatmul.f32.gmra.mxu0 %v400
      %v402 = vpop.f32.mrf.mxu0
      %v403 = vadd.f32 0.0, %v402
      %v404 = vand.u32 %v317, 4294901760
      %v405 = vsub.f32 %v317, %v404
      %v406 = vand.u32 %v405, 4294901760
      %v407 = vsub.f32 %v405, %v406
      %v408 = vand.u32 %v407, 4294901760
      %409 = vmatmul.f32.gmra.mxu0 %v408
      %v410 = vpop.f32.mrf.mxu0
      %v411 = vadd.f32 0.0, %v410
      %v412 = vand.u32 %v318, 4294901760
      %v413 = vsub.f32 %v318, %v412
      %v414 = vand.u32 %v413, 4294901760
      %v415 = vsub.f32 %v413, %v414
      %v416 = vand.u32 %v415, 4294901760
      %417 = vmatmul.f32.gmra.mxu0 %v416
      %v418 = vpop.f32.mrf.mxu0
      %v419 = vadd.f32 0.0, %v418
      %v420 = vand.u32 %v319, 4294901760
      %v421 = vsub.f32 %v319, %v420
      %v422 = vand.u32 %v421, 4294901760
      %v423 = vsub.f32 %v421, %v422
      %v424 = vand.u32 %v423, 4294901760
      %425 = vmatmul.f32.gmra.mxu0 %v424
      %v426 = vpop.f32.mrf.mxu0
      %v427 = vadd.f32 0.0, %v426
      %v428 = vand.u32 %v320, 4294901760
      %v429 = vsub.f32 %v320, %v428
      %v430 = vand.u32 %v429, 4294901760
      %v431 = vsub.f32 %v429, %v430
      %v432 = vand.u32 %v431, 4294901760
      %433 = vmatmul.f32.gmra.mxu0 %v432
      %v434 = vpop.f32.mrf.mxu0
      %v435 = vadd.f32 0.0, %v434
      %v436 = vand.u32 %v321, 4294901760
      %v437 = vsub.f32 %v321, %v436
      %v438 = vand.u32 %v437, 4294901760
      %v439 = vsub.f32 %v437, %v438
      %v440 = vand.u32 %v439, 4294901760
      %441 = vmatmul.f32.gmra.mxu0 %v440
      %v442 = vpop.f32.mrf.mxu0
      %v443 = vadd.f32 0.0, %v442
      %v444 = vand.u32 %v322, 4294901760
      %v445 = vsub.f32 %v322, %v444
      %v446 = vand.u32 %v445, 4294901760
      %v447 = vsub.f32 %v445, %v446
      %v448 = vand.u32 %v447, 4294901760
      %449 = vmatmul.f32.gmra.mxu0 %v448
      %v450 = vpop.f32.mrf.mxu0
      %v451 = vadd.f32 0.0, %v450
      %v452 = vand.u32 %v323, 4294901760
      %v453 = vsub.f32 %v323, %v452
      %v454 = vand.u32 %v453, 4294901760
      %v455 = vsub.f32 %v453, %v454
      %v456 = vand.u32 %v455, 4294901760
      %457 = vmatmul.f32.gmra.mxu0 %v456
      %v458 = vpop.f32.mrf.mxu0
      %v459 = vadd.f32 0.0, %v458
      %v460 = vand.u32 %v324, 4294901760
      %v461 = vsub.f32 %v324, %v460
      %v462 = vand.u32 %v461, 4294901760
      %v463 = vsub.f32 %v461, %v462
      %v464 = vand.u32 %v463, 4294901760
      %465 = vmatmul.f32.gmra.mxu0 %v464
      %v466 = vpop.f32.mrf.mxu0
      %v467 = vadd.f32 0.0, %v466
      %v468 = vand.u32 %v325, 4294901760
      %v469 = vsub.f32 %v325, %v468
      %v470 = vand.u32 %v469, 4294901760
      %v471 = vsub.f32 %v469, %v470
      %v472 = vand.u32 %v471, 4294901760
      %473 = vmatmul.f32.gmra.mxu0 %v472
      %v474 = vpop.f32.mrf.mxu0
      %v475 = vadd.f32 0.0, %v474
      %v476 = vand.u32 %v326, 4294901760
      %v477 = vsub.f32 %v326, %v476
      %v478 = vand.u32 %v477, 4294901760
      %v479 = vsub.f32 %v477, %v478
      %v480 = vand.u32 %v479, 4294901760
      %481 = vmatmul.f32.gmra.mxu0 %v480
      %v482 = vpop.f32.mrf.mxu0
      %v483 = vadd.f32 0.0, %v482
      %v484 = vand.u32 %v327, 4294901760
      %v485 = vsub.f32 %v327, %v484
      %v486 = vand.u32 %v485, 4294901760
      %v487 = vsub.f32 %v485, %v486
      %v488 = vand.u32 %v487, 4294901760
      %489 = vmatmul.f32.gmra.mxu0 %v488
      %v490 = vpop.f32.mrf.mxu0
      %v491 = vadd.f32 0.0, %v490
      %v492 = vand.u32 %v328, 4294901760
      %v493 = vsub.f32 %v328, %v492
      %v494 = vand.u32 %v493, 4294901760
      %v495 = vsub.f32 %v493, %v494
      %v496 = vand.u32 %v495, 4294901760
      %497 = vmatmul.f32.gmra.mxu0 %v496
      %v498 = vpop.f32.mrf.mxu0
      %v499 = vadd.f32 0.0, %v498
      %v500 = vand.u32 %v329, 4294901760
      %v501 = vsub.f32 %v329, %v500
      %v502 = vand.u32 %v501, 4294901760
      %v503 = vsub.f32 %v501, %v502
      %v504 = vand.u32 %v503, 4294901760
      %505 = vmatmul.f32.gmra.mxu0 %v504
      %v506 = vpop.f32.mrf.mxu0
      %v507 = vadd.f32 0.0, %v506
      %v508 = vand.u32 %v330, 4294901760
      %v509 = vsub.f32 %v330, %v508
      %v510 = vand.u32 %v509, 4294901760
      %v511 = vsub.f32 %v509, %v510
      %v512 = vand.u32 %v511, 4294901760
      %513 = vmatmul.f32.gmra.mxu0 %v512
      %v514 = vpop.f32.mrf.mxu0
      %v515 = vadd.f32 0.0, %v514
      %v516 = vand.u32 %v331, 4294901760
      %v517 = vsub.f32 %v331, %v516
      %v518 = vand.u32 %v517, 4294901760
      %v519 = vsub.f32 %v517, %v518
      %v520 = vand.u32 %v519, 4294901760
      %521 = vmatmul.f32.gmra.mxu0 %v520
      %v522 = vpop.f32.mrf.mxu0
      %v523 = vadd.f32 0.0, %v522
      %524 = vdwg.mxu0
      %v525 = vand.u32 %v347, 4294901760
      %v526 = vsub.f32 %v347, %v525
      %v527 = vand.u32 %v526, 4294901760
      %v528 = vsub.f32 %v526, %v527
      %v529 = vand.u32 %v528, 4294901760
      %530 = vmatpush.msra.mxu0 %v529
      %v531 = vand.u32 %v346, 4294901760
      %v532 = vsub.f32 %v346, %v531
      %v533 = vand.u32 %v532, 4294901760
      %v534 = vsub.f32 %v532, %v533
      %v535 = vand.u32 %v534, 4294901760
      %536 = vmatpush.msra.mxu0 %v535
      %v537 = vand.u32 %v345, 4294901760
      %v538 = vsub.f32 %v345, %v537
      %v539 = vand.u32 %v538, 4294901760
      %v540 = vsub.f32 %v538, %v539
      %v541 = vand.u32 %v540, 4294901760
      %542 = vmatpush.msra.mxu0 %v541
      %v543 = vand.u32 %v344, 4294901760
      %v544 = vsub.f32 %v344, %v543
      %v545 = vand.u32 %v544, 4294901760
      %v546 = vsub.f32 %v544, %v545
      %v547 = vand.u32 %v546, 4294901760
      %548 = vmatpush.msra.mxu0 %v547
      %v549 = vand.u32 %v343, 4294901760
      %v550 = vsub.f32 %v343, %v549
      %v551 = vand.u32 %v550, 4294901760
      %v552 = vsub.f32 %v550, %v551
      %v553 = vand.u32 %v552, 4294901760
      %554 = vmatpush.msra.mxu0 %v553
      %v555 = vand.u32 %v342, 4294901760
      %v556 = vsub.f32 %v342, %v555
      %v557 = vand.u32 %v556, 4294901760
      %v558 = vsub.f32 %v556, %v557
      %v559 = vand.u32 %v558, 4294901760
      %560 = vmatpush.msra.mxu0 %v559
      %v561 = vand.u32 %v341, 4294901760
      %v562 = vsub.f32 %v341, %v561
      %v563 = vand.u32 %v562, 4294901760
      %v564 = vsub.f32 %v562, %v563
      %v565 = vand.u32 %v564, 4294901760
      %566 = vmatpush.msra.mxu0 %v565
      %v567 = vand.u32 %v340, 4294901760
      %v568 = vsub.f32 %v340, %v567
      %v569 = vand.u32 %v568, 4294901760
      %v570 = vsub.f32 %v568, %v569
      %v571 = vand.u32 %v570, 4294901760
      %572 = vmatpush.msra.mxu0 %v571
      %v573 = vand.u32 %v339, 4294901760
      %v574 = vsub.f32 %v339, %v573
      %v575 = vand.u32 %v574, 4294901760
      %v576 = vsub.f32 %v574, %v575
      %v577 = vand.u32 %v576, 4294901760
      %578 = vmatpush.msra.mxu0 %v577
      %v579 = vand.u32 %v338, 4294901760
      %v580 = vsub.f32 %v338, %v579
      %v581 = vand.u32 %v580, 4294901760
      %v582 = vsub.f32 %v580, %v581
      %v583 = vand.u32 %v582, 4294901760
      %584 = vmatpush.msra.mxu0 %v583
      %v585 = vand.u32 %v337, 4294901760
      %v586 = vsub.f32 %v337, %v585
      %v587 = vand.u32 %v586, 4294901760
      %v588 = vsub.f32 %v586, %v587
      %v589 = vand.u32 %v588, 4294901760
      %590 = vmatpush.msra.mxu0 %v589
      %v591 = vand.u32 %v336, 4294901760
      %v592 = vsub.f32 %v336, %v591
      %v593 = vand.u32 %v592, 4294901760
      %v594 = vsub.f32 %v592, %v593
      %v595 = vand.u32 %v594, 4294901760
      %596 = vmatpush.msra.mxu0 %v595
      %v597 = vand.u32 %v335, 4294901760
      %v598 = vsub.f32 %v335, %v597
      %v599 = vand.u32 %v598, 4294901760
      %v600 = vsub.f32 %v598, %v599
      %v601 = vand.u32 %v600, 4294901760
      %602 = vmatpush.msra.mxu0 %v601
      %v603 = vand.u32 %v334, 4294901760
      %v604 = vsub.f32 %v334, %v603
      %v605 = vand.u32 %v604, 4294901760
      %v606 = vsub.f32 %v604, %v605
      %v607 = vand.u32 %v606, 4294901760
      %608 = vmatpush.msra.mxu0 %v607
      %v609 = vand.u32 %v333, 4294901760
      %v610 = vsub.f32 %v333, %v609
      %v611 = vand.u32 %v610, 4294901760
      %v612 = vsub.f32 %v610, %v611
      %v613 = vand.u32 %v612, 4294901760
      %614 = vmatpush.msra.mxu0 %v613
      %v615 = vand.u32 %v332, 4294901760
      %v616 = vsub.f32 %v332, %v615
      %v617 = vand.u32 %v616, 4294901760
      %v618 = vsub.f32 %v616, %v617
      %v619 = vand.u32 %v618, 4294901760
      %620 = vmatpush.msra.mxu0 %v619
      %v621 = vand.u32 %v316, 4294901760
      %622 = vmatmul.f32.gmra.mxu0 %v621
      %v623 = vpop.f32.mrf.mxu0
      %v624 = vadd.f32 %v403, %v623
      %v625 = vand.u32 %v317, 4294901760
      %626 = vmatmul.f32.gmra.mxu0 %v625
      %v627 = vpop.f32.mrf.mxu0
      %v628 = vadd.f32 %v411, %v627
      %v629 = vand.u32 %v318, 4294901760
      %630 = vmatmul.f32.gmra.mxu0 %v629
      %v631 = vpop.f32.mrf.mxu0
      %v632 = vadd.f32 %v419, %v631
      %v633 = vand.u32 %v319, 4294901760
      %634 = vmatmul.f32.gmra.mxu0 %v633
      %v635 = vpop.f32.mrf.mxu0
      %v636 = vadd.f32 %v427, %v635
      %v637 = vand.u32 %v320, 4294901760
      %638 = vmatmul.f32.gmra.mxu0 %v637
      %v639 = vpop.f32.mrf.mxu0
      %v640 = vadd.f32 %v435, %v639
      %v641 = vand.u32 %v321, 4294901760
      %642 = vmatmul.f32.gmra.mxu0 %v641
      %v643 = vpop.f32.mrf.mxu0
      %v644 = vadd.f32 %v443, %v643
      %v645 = vand.u32 %v322, 4294901760
      %646 = vmatmul.f32.gmra.mxu0 %v645
      %v647 = vpop.f32.mrf.mxu0
      %v648 = vadd.f32 %v451, %v647
      %v649 = vand.u32 %v323, 4294901760
      %650 = vmatmul.f32.gmra.mxu0 %v649
      %v651 = vpop.f32.mrf.mxu0
      %v652 = vadd.f32 %v459, %v651
      %v653 = vand.u32 %v324, 4294901760
      %654 = vmatmul.f32.gmra.mxu0 %v653
      %v655 = vpop.f32.mrf.mxu0
      %v656 = vadd.f32 %v467, %v655
      %v657 = vand.u32 %v325, 4294901760
      %658 = vmatmul.f32.gmra.mxu0 %v657
      %v659 = vpop.f32.mrf.mxu0
      %v660 = vadd.f32 %v475, %v659
      %v661 = vand.u32 %v326, 4294901760
      %662 = vmatmul.f32.gmra.mxu0 %v661
      %v663 = vpop.f32.mrf.mxu0
      %v664 = vadd.f32 %v483, %v663
      %v665 = vand.u32 %v327, 4294901760
      %666 = vmatmul.f32.gmra.mxu0 %v665
      %v667 = vpop.f32.mrf.mxu0
      %v668 = vadd.f32 %v491, %v667
      %v669 = vand.u32 %v328, 4294901760
      %670 = vmatmul.f32.gmra.mxu0 %v669
      %v671 = vpop.f32.mrf.mxu0
      %v672 = vadd.f32 %v499, %v671
      %v673 = vand.u32 %v329, 4294901760
      %674 = vmatmul.f32.gmra.mxu0 %v673
      %v675 = vpop.f32.mrf.mxu0
      %v676 = vadd.f32 %v507, %v675
      %v677 = vand.u32 %v330, 4294901760
      %678 = vmatmul.f32.gmra.mxu0 %v677
      %v679 = vpop.f32.mrf.mxu0
      %v680 = vadd.f32 %v515, %v679
      %v681 = vand.u32 %v331, 4294901760
      %682 = vmatmul.f32.gmra.mxu0 %v681
      %v683 = vpop.f32.mrf.mxu0
      %v684 = vadd.f32 %v523, %v683
      %685 = vdwg.mxu0
      %v686 = vand.u32 %v347, 4294901760
      %v687 = vsub.f32 %v347, %v686
      %688 = vmatpush.msra.mxu0 %v687
      %v689 = vand.u32 %v346, 4294901760
      %v690 = vsub.f32 %v346, %v689
      %691 = vmatpush.msra.mxu0 %v690
      %v692 = vand.u32 %v345, 4294901760
      %v693 = vsub.f32 %v345, %v692
      %694 = vmatpush.msra.mxu0 %v693
      %v695 = vand.u32 %v344, 4294901760
      %v696 = vsub.f32 %v344, %v695
      %697 = vmatpush.msra.mxu0 %v696
      %v698 = vand.u32 %v343, 4294901760
      %v699 = vsub.f32 %v343, %v698
      %700 = vmatpush.msra.mxu0 %v699
      %v701 = vand.u32 %v342, 4294901760
      %v702 = vsub.f32 %v342, %v701
      %703 = vmatpush.msra.mxu0 %v702
      %v704 = vand.u32 %v341, 4294901760
      %v705 = vsub.f32 %v341, %v704
      %706 = vmatpush.msra.mxu0 %v705
      %v707 = vand.u32 %v340, 4294901760
      %v708 = vsub.f32 %v340, %v707
      %709 = vmatpush.msra.mxu0 %v708
      %v710 = vand.u32 %v339, 4294901760
      %v711 = vsub.f32 %v339, %v710
      %712 = vmatpush.msra.mxu0 %v711
      %v713 = vand.u32 %v338, 4294901760
      %v714 = vsub.f32 %v338, %v713
      %715 = vmatpush.msra.mxu0 %v714
      %v716 = vand.u32 %v337, 4294901760
      %v717 = vsub.f32 %v337, %v716
      %718 = vmatpush.msra.mxu0 %v717
      %v719 = vand.u32 %v336, 4294901760
      %v720 = vsub.f32 %v336, %v719
      %721 = vmatpush.msra.mxu0 %v720
      %v722 = vand.u32 %v335, 4294901760
      %v723 = vsub.f32 %v335, %v722
      %724 = vmatpush.msra.mxu0 %v723
      %v725 = vand.u32 %v334, 4294901760
      %v726 = vsub.f32 %v334, %v725
      %727 = vmatpush.msra.mxu0 %v726
      %v728 = vand.u32 %v333, 4294901760
      %v729 = vsub.f32 %v333, %v728
      %730 = vmatpush.msra.mxu0 %v729
      %v731 = vand.u32 %v332, 4294901760
      %v732 = vsub.f32 %v332, %v731
      %733 = vmatpush.msra.mxu0 %v732
      %v734 = vand.u32 %v316, 4294901760
      %v735 = vsub.f32 %v316, %v734
      %736 = vmatmul.f32.gmra.mxu0 %v735
      %v737 = vpop.f32.mrf.mxu0
      %v738 = vadd.f32 %v624, %v737
      %v739 = vand.u32 %v317, 4294901760
      %v740 = vsub.f32 %v317, %v739
      %741 = vmatmul.f32.gmra.mxu0 %v740
      %v742 = vpop.f32.mrf.mxu0
      %v743 = vadd.f32 %v628, %v742
      %v744 = vand.u32 %v318, 4294901760
      %v745 = vsub.f32 %v318, %v744
      %746 = vmatmul.f32.gmra.mxu0 %v745
      %v747 = vpop.f32.mrf.mxu0
      %v748 = vadd.f32 %v632, %v747
      %v749 = vand.u32 %v319, 4294901760
      %v750 = vsub.f32 %v319, %v749
      %751 = vmatmul.f32.gmra.mxu0 %v750
      %v752 = vpop.f32.mrf.mxu0
      %v753 = vadd.f32 %v636, %v752
      %v754 = vand.u32 %v320, 4294901760
      %v755 = vsub.f32 %v320, %v754
      %756 = vmatmul.f32.gmra.mxu0 %v755
      %v757 = vpop.f32.mrf.mxu0
      %v758 = vadd.f32 %v640, %v757
      %v759 = vand.u32 %v321, 4294901760
      %v760 = vsub.f32 %v321, %v759
      %761 = vmatmul.f32.gmra.mxu0 %v760
      %v762 = vpop.f32.mrf.mxu0
      %v763 = vadd.f32 %v644, %v762
      %v764 = vand.u32 %v322, 4294901760
      %v765 = vsub.f32 %v322, %v764
      %766 = vmatmul.f32.gmra.mxu0 %v765
      %v767 = vpop.f32.mrf.mxu0
      %v768 = vadd.f32 %v648, %v767
      %v769 = vand.u32 %v323, 4294901760
      %v770 = vsub.f32 %v323, %v769
      %771 = vmatmul.f32.gmra.mxu0 %v770
      %v772 = vpop.f32.mrf.mxu0
      %v773 = vadd.f32 %v652, %v772
      %v774 = vand.u32 %v324, 4294901760
      %v775 = vsub.f32 %v324, %v774
      %776 = vmatmul.f32.gmra.mxu0 %v775
      %v777 = vpop.f32.mrf.mxu0
      %v778 = vadd.f32 %v656, %v777
      %v779 = vand.u32 %v325, 4294901760
      %v780 = vsub.f32 %v325, %v779
      %781 = vmatmul.f32.gmra.mxu0 %v780
      %v782 = vpop.f32.mrf.mxu0
      %v783 = vadd.f32 %v660, %v782
      %v784 = vand.u32 %v326, 4294901760
      %v785 = vsub.f32 %v326, %v784
      %786 = vmatmul.f32.gmra.mxu0 %v785
      %v787 = vpop.f32.mrf.mxu0
      %v788 = vadd.f32 %v664, %v787
      %v789 = vand.u32 %v327, 4294901760
      %v790 = vsub.f32 %v327, %v789
      %791 = vmatmul.f32.gmra.mxu0 %v790
      %v792 = vpop.f32.mrf.mxu0
      %v793 = vadd.f32 %v668, %v792
      %v794 = vand.u32 %v328, 4294901760
      %v795 = vsub.f32 %v328, %v794
      %796 = vmatmul.f32.gmra.mxu0 %v795
      %v797 = vpop.f32.mrf.mxu0
      %v798 = vadd.f32 %v672, %v797
      %v799 = vand.u32 %v329, 4294901760
      %v800 = vsub.f32 %v329, %v799
      %801 = vmatmul.f32.gmra.mxu0 %v800
      %v802 = vpop.f32.mrf.mxu0
      %v803 = vadd.f32 %v676, %v802
      %v804 = vand.u32 %v330, 4294901760
      %v805 = vsub.f32 %v330, %v804
      %806 = vmatmul.f32.gmra.mxu0 %v805
      %v807 = vpop.f32.mrf.mxu0
      %v808 = vadd.f32 %v680, %v807
      %v809 = vand.u32 %v331, 4294901760
      %v810 = vsub.f32 %v331, %v809
      %811 = vmatmul.f32.gmra.mxu0 %v810
      %v812 = vpop.f32.mrf.mxu0
      %v813 = vadd.f32 %v684, %v812
      %814 = vdwg.mxu0
      %v815 = vand.u32 %v347, 4294901760
      %816 = vmatpush.msra.mxu0 %v815
      %v817 = vand.u32 %v346, 4294901760
      %818 = vmatpush.msra.mxu0 %v817
      %v819 = vand.u32 %v345, 4294901760
      %820 = vmatpush.msra.mxu0 %v819
      %v821 = vand.u32 %v344, 4294901760
      %822 = vmatpush.msra.mxu0 %v821
      %v823 = vand.u32 %v343, 4294901760
      %824 = vmatpush.msra.mxu0 %v823
      %v825 = vand.u32 %v342, 4294901760
      %826 = vmatpush.msra.mxu0 %v825
      %v827 = vand.u32 %v341, 4294901760
      %828 = vmatpush.msra.mxu0 %v827
      %v829 = vand.u32 %v340, 4294901760
      %830 = vmatpush.msra.mxu0 %v829
      %v831 = vand.u32 %v339, 4294901760
      %832 = vmatpush.msra.mxu0 %v831
      %v833 = vand.u32 %v338, 4294901760
      %834 = vmatpush.msra.mxu0 %v833
      %v835 = vand.u32 %v337, 4294901760
      %836 = vmatpush.msra.mxu0 %v835
      %v837 = vand.u32 %v336, 4294901760
      %838 = vmatpush.msra.mxu0 %v837
      %v839 = vand.u32 %v335, 4294901760
      %840 = vmatpush.msra.mxu0 %v839
      %v841 = vand.u32 %v334, 4294901760
      %842 = vmatpush.msra.mxu0 %v841
      %v843 = vand.u32 %v333, 4294901760
      %844 = vmatpush.msra.mxu0 %v843
      %v845 = vand.u32 %v332, 4294901760
      %846 = vmatpush.msra.mxu0 %v845
      %v847 = vand.u32 %v316, 4294901760
      %v848 = vsub.f32 %v316, %v847
      %v849 = vand.u32 %v848, 4294901760
      %850 = vmatmul.f32.gmra.mxu0 %v849
      %v851 = vpop.f32.mrf.mxu0
      %v852 = vadd.f32 %v738, %v851
      %v853 = vand.u32 %v317, 4294901760
      %v854 = vsub.f32 %v317, %v853
      %v855 = vand.u32 %v854, 4294901760
      %856 = vmatmul.f32.gmra.mxu0 %v855
      %v857 = vpop.f32.mrf.mxu0
      %v858 = vadd.f32 %v743, %v857
      %v859 = vand.u32 %v318, 4294901760
      %v860 = vsub.f32 %v318, %v859
      %v861 = vand.u32 %v860, 4294901760
      %862 = vmatmul.f32.gmra.mxu0 %v861
      %v863 = vpop.f32.mrf.mxu0
      %v864 = vadd.f32 %v748, %v863
      %v865 = vand.u32 %v319, 4294901760
      %v866 = vsub.f32 %v319, %v865
      %v867 = vand.u32 %v866, 4294901760
      %868 = vmatmul.f32.gmra.mxu0 %v867
      %v869 = vpop.f32.mrf.mxu0
      %v870 = vadd.f32 %v753, %v869
      %v871 = vand.u32 %v320, 4294901760
      %v872 = vsub.f32 %v320, %v871
      %v873 = vand.u32 %v872, 4294901760
      %874 = vmatmul.f32.gmra.mxu0 %v873
      %v875 = vpop.f32.mrf.mxu0
      %v876 = vadd.f32 %v758, %v875
      %v877 = vand.u32 %v321, 4294901760
      %v878 = vsub.f32 %v321, %v877
      %v879 = vand.u32 %v878, 4294901760
      %880 = vmatmul.f32.gmra.mxu0 %v879
      %v881 = vpop.f32.mrf.mxu0
      %v882 = vadd.f32 %v763, %v881
      %v883 = vand.u32 %v322, 4294901760
      %v884 = vsub.f32 %v322, %v883
      %v885 = vand.u32 %v884, 4294901760
      %886 = vmatmul.f32.gmra.mxu0 %v885
      %v887 = vpop.f32.mrf.mxu0
      %v888 = vadd.f32 %v768, %v887
      %v889 = vand.u32 %v323, 4294901760
      %v890 = vsub.f32 %v323, %v889
      %v891 = vand.u32 %v890, 4294901760
      %892 = vmatmul.f32.gmra.mxu0 %v891
      %v893 = vpop.f32.mrf.mxu0
      %v894 = vadd.f32 %v773, %v893
      %v895 = vand.u32 %v324, 4294901760
      %v896 = vsub.f32 %v324, %v895
      %v897 = vand.u32 %v896, 4294901760
      %898 = vmatmul.f32.gmra.mxu0 %v897
      %v899 = vpop.f32.mrf.mxu0
      %v900 = vadd.f32 %v778, %v899
      %v901 = vand.u32 %v325, 4294901760
      %v902 = vsub.f32 %v325, %v901
      %v903 = vand.u32 %v902, 4294901760
      %904 = vmatmul.f32.gmra.mxu0 %v903
      %v905 = vpop.f32.mrf.mxu0
      %v906 = vadd.f32 %v783, %v905
      %v907 = vand.u32 %v326, 4294901760
      %v908 = vsub.f32 %v326, %v907
      %v909 = vand.u32 %v908, 4294901760
      %910 = vmatmul.f32.gmra.mxu0 %v909
      %v911 = vpop.f32.mrf.mxu0
      %v912 = vadd.f32 %v788, %v911
      %v913 = vand.u32 %v327, 4294901760
      %v914 = vsub.f32 %v327, %v913
      %v915 = vand.u32 %v914, 4294901760
      %916 = vmatmul.f32.gmra.mxu0 %v915
      %v917 = vpop.f32.mrf.mxu0
      %v918 = vadd.f32 %v793, %v917
      %v919 = vand.u32 %v328, 4294901760
      %v920 = vsub.f32 %v328, %v919
      %v921 = vand.u32 %v920, 4294901760
      %922 = vmatmul.f32.gmra.mxu0 %v921
      %v923 = vpop.f32.mrf.mxu0
      %v924 = vadd.f32 %v798, %v923
      %v925 = vand.u32 %v329, 4294901760
      %v926 = vsub.f32 %v329, %v925
      %v927 = vand.u32 %v926, 4294901760
      %928 = vmatmul.f32.gmra.mxu0 %v927
      %v929 = vpop.f32.mrf.mxu0
      %v930 = vadd.f32 %v803, %v929
      %v931 = vand.u32 %v330, 4294901760
      %v932 = vsub.f32 %v330, %v931
      %v933 = vand.u32 %v932, 4294901760
      %934 = vmatmul.f32.gmra.mxu0 %v933
      %v935 = vpop.f32.mrf.mxu0
      %v936 = vadd.f32 %v808, %v935
      %v937 = vand.u32 %v331, 4294901760
      %v938 = vsub.f32 %v331, %v937
      %v939 = vand.u32 %v938, 4294901760
      %940 = vmatmul.f32.gmra.mxu0 %v939
      %v941 = vpop.f32.mrf.mxu0
      %v942 = vadd.f32 %v813, %v941
      %943 = vdwg.mxu0
      %v944 = vand.u32 %v347, 4294901760
      %v945 = vsub.f32 %v347, %v944
      %v946 = vand.u32 %v945, 4294901760
      %947 = vmatpush.msra.mxu0 %v946
      %v948 = vand.u32 %v346, 4294901760
      %v949 = vsub.f32 %v346, %v948
      %v950 = vand.u32 %v949, 4294901760
      %951 = vmatpush.msra.mxu0 %v950
      %v952 = vand.u32 %v345, 4294901760
      %v953 = vsub.f32 %v345, %v952
      %v954 = vand.u32 %v953, 4294901760
      %955 = vmatpush.msra.mxu0 %v954
      %v956 = vand.u32 %v344, 4294901760
      %v957 = vsub.f32 %v344, %v956
      %v958 = vand.u32 %v957, 4294901760
      %959 = vmatpush.msra.mxu0 %v958
      %v960 = vand.u32 %v343, 4294901760
      %v961 = vsub.f32 %v343, %v960
      %v962 = vand.u32 %v961, 4294901760
      %963 = vmatpush.msra.mxu0 %v962
      %v964 = vand.u32 %v342, 4294901760
      %v965 = vsub.f32 %v342, %v964
      %v966 = vand.u32 %v965, 4294901760
      %967 = vmatpush.msra.mxu0 %v966
      %v968 = vand.u32 %v341, 4294901760
      %v969 = vsub.f32 %v341, %v968
      %v970 = vand.u32 %v969, 4294901760
      %971 = vmatpush.msra.mxu0 %v970
      %v972 = vand.u32 %v340, 4294901760
      %v973 = vsub.f32 %v340, %v972
      %v974 = vand.u32 %v973, 4294901760
      %975 = vmatpush.msra.mxu0 %v974
      %v976 = vand.u32 %v339, 4294901760
      %v977 = vsub.f32 %v339, %v976
      %v978 = vand.u32 %v977, 4294901760
      %979 = vmatpush.msra.mxu0 %v978
      %v980 = vand.u32 %v338, 4294901760
      %v981 = vsub.f32 %v338, %v980
      %v982 = vand.u32 %v981, 4294901760
      %983 = vmatpush.msra.mxu0 %v982
      %v984 = vand.u32 %v337, 4294901760
      %v985 = vsub.f32 %v337, %v984
      %v986 = vand.u32 %v985, 4294901760
      %987 = vmatpush.msra.mxu0 %v986
      %v988 = vand.u32 %v336, 4294901760
      %v989 = vsub.f32 %v336, %v988
      %v990 = vand.u32 %v989, 4294901760
      %991 = vmatpush.msra.mxu0 %v990
      %v992 = vand.u32 %v335, 4294901760
      %v993 = vsub.f32 %v335, %v992
      %v994 = vand.u32 %v993, 4294901760
      %995 = vmatpush.msra.mxu0 %v994
      %v996 = vand.u32 %v334, 4294901760
      %v997 = vsub.f32 %v334, %v996
      %v998 = vand.u32 %v997, 4294901760
      %999 = vmatpush.msra.mxu0 %v998
      %v1000 = vand.u32 %v333, 4294901760
      %v1001 = vsub.f32 %v333, %v1000
      %v1002 = vand.u32 %v1001, 4294901760
      %1003 = vmatpush.msra.mxu0 %v1002
      %v1004 = vand.u32 %v332, 4294901760
      %v1005 = vsub.f32 %v332, %v1004
      %v1006 = vand.u32 %v1005, 4294901760
      %1007 = vmatpush.msra.mxu0 %v1006
      %v1008 = vand.u32 %v316, 4294901760
      %1009 = vmatmul.f32.gmra.mxu0 %v1008
      %v1010 = vpop.f32.mrf.mxu0
      %v1011 = vadd.f32 %v852, %v1010
      %v1012 = vand.u32 %v317, 4294901760
      %1013 = vmatmul.f32.gmra.mxu0 %v1012
      %v1014 = vpop.f32.mrf.mxu0
      %v1015 = vadd.f32 %v858, %v1014
      %v1016 = vand.u32 %v318, 4294901760
      %1017 = vmatmul.f32.gmra.mxu0 %v1016
      %v1018 = vpop.f32.mrf.mxu0
      %v1019 = vadd.f32 %v864, %v1018
      %v1020 = vand.u32 %v319, 4294901760
      %1021 = vmatmul.f32.gmra.mxu0 %v1020
      %v1022 = vpop.f32.mrf.mxu0
      %v1023 = vadd.f32 %v870, %v1022
      %v1024 = vand.u32 %v320, 4294901760
      %1025 = vmatmul.f32.gmra.mxu0 %v1024
      %v1026 = vpop.f32.mrf.mxu0
      %v1027 = vadd.f32 %v876, %v1026
      %v1028 = vand.u32 %v321, 4294901760
      %1029 = vmatmul.f32.gmra.mxu0 %v1028
      %v1030 = vpop.f32.mrf.mxu0
      %v1031 = vadd.f32 %v882, %v1030
      %v1032 = vand.u32 %v322, 4294901760
      %1033 = vmatmul.f32.gmra.mxu0 %v1032
      %v1034 = vpop.f32.mrf.mxu0
      %v1035 = vadd.f32 %v888, %v1034
      %v1036 = vand.u32 %v323, 4294901760
      %1037 = vmatmul.f32.gmra.mxu0 %v1036
      %v1038 = vpop.f32.mrf.mxu0
      %v1039 = vadd.f32 %v894, %v1038
      %v1040 = vand.u32 %v324, 4294901760
      %1041 = vmatmul.f32.gmra.mxu0 %v1040
      %v1042 = vpop.f32.mrf.mxu0
      %v1043 = vadd.f32 %v900, %v1042
      %v1044 = vand.u32 %v325, 4294901760
      %1045 = vmatmul.f32.gmra.mxu0 %v1044
      %v1046 = vpop.f32.mrf.mxu0
      %v1047 = vadd.f32 %v906, %v1046
      %v1048 = vand.u32 %v326, 4294901760
      %1049 = vmatmul.f32.gmra.mxu0 %v1048
      %v1050 = vpop.f32.mrf.mxu0
      %v1051 = vadd.f32 %v912, %v1050
      %v1052 = vand.u32 %v327, 4294901760
      %1053 = vmatmul.f32.gmra.mxu0 %v1052
      %v1054 = vpop.f32.mrf.mxu0
      %v1055 = vadd.f32 %v918, %v1054
      %v1056 = vand.u32 %v328, 4294901760
      %1057 = vmatmul.f32.gmra.mxu0 %v1056
      %v1058 = vpop.f32.mrf.mxu0
      %v1059 = vadd.f32 %v924, %v1058
      %v1060 = vand.u32 %v329, 4294901760
      %1061 = vmatmul.f32.gmra.mxu0 %v1060
      %v1062 = vpop.f32.mrf.mxu0
      %v1063 = vadd.f32 %v930, %v1062
      %v1064 = vand.u32 %v330, 4294901760
      %1065 = vmatmul.f32.gmra.mxu0 %v1064
      %v1066 = vpop.f32.mrf.mxu0
      %v1067 = vadd.f32 %v936, %v1066
      %v1068 = vand.u32 %v331, 4294901760
      %1069 = vmatmul.f32.gmra.mxu0 %v1068
      %v1070 = vpop.f32.mrf.mxu0
      %v1071 = vadd.f32 %v942, %v1070
      %1072 = vdwg.mxu0
      %v1073 = vand.u32 %v347, 4294901760
      %1074 = vmatpush.msra.mxu0 %v1073
      %v1075 = vand.u32 %v346, 4294901760
      %1076 = vmatpush.msra.mxu0 %v1075
      %v1077 = vand.u32 %v345, 4294901760
      %1078 = vmatpush.msra.mxu0 %v1077
      %v1079 = vand.u32 %v344, 4294901760
      %1080 = vmatpush.msra.mxu0 %v1079
      %v1081 = vand.u32 %v343, 4294901760
      %1082 = vmatpush.msra.mxu0 %v1081
      %v1083 = vand.u32 %v342, 4294901760
      %1084 = vmatpush.msra.mxu0 %v1083
      %v1085 = vand.u32 %v341, 4294901760
      %1086 = vmatpush.msra.mxu0 %v1085
      %v1087 = vand.u32 %v340, 4294901760
      %1088 = vmatpush.msra.mxu0 %v1087
      %v1089 = vand.u32 %v339, 4294901760
      %1090 = vmatpush.msra.mxu0 %v1089
      %v1091 = vand.u32 %v338, 4294901760
      %1092 = vmatpush.msra.mxu0 %v1091
      %v1093 = vand.u32 %v337, 4294901760
      %1094 = vmatpush.msra.mxu0 %v1093
      %v1095 = vand.u32 %v336, 4294901760
      %1096 = vmatpush.msra.mxu0 %v1095
      %v1097 = vand.u32 %v335, 4294901760
      %1098 = vmatpush.msra.mxu0 %v1097
      %v1099 = vand.u32 %v334, 4294901760
      %1100 = vmatpush.msra.mxu0 %v1099
      %v1101 = vand.u32 %v333, 4294901760
      %1102 = vmatpush.msra.mxu0 %v1101
      %v1103 = vand.u32 %v332, 4294901760
      %1104 = vmatpush.msra.mxu0 %v1103
      %v1105 = vand.u32 %v316, 4294901760
      %1106 = vmatmul.f32.gmra.mxu0 %v1105
      %v1107 = vpop.f32.mrf.mxu0
      %v1108 = vadd.f32 %v1011, %v1107
      %v1109 = vand.u32 %v317, 4294901760
      %1110 = vmatmul.f32.gmra.mxu0 %v1109
      %v1111 = vpop.f32.mrf.mxu0
      %v1112 = vadd.f32 %v1015, %v1111
      %v1113 = vand.u32 %v318, 4294901760
      %1114 = vmatmul.f32.gmra.mxu0 %v1113
      %v1115 = vpop.f32.mrf.mxu0
      %v1116 = vadd.f32 %v1019, %v1115
      %v1117 = vand.u32 %v319, 4294901760
      %1118 = vmatmul.f32.gmra.mxu0 %v1117
      %v1119 = vpop.f32.mrf.mxu0
      %v1120 = vadd.f32 %v1023, %v1119
      %v1121 = vand.u32 %v320, 4294901760
      %1122 = vmatmul.f32.gmra.mxu0 %v1121
      %v1123 = vpop.f32.mrf.mxu0
      %v1124 = vadd.f32 %v1027, %v1123
      %v1125 = vand.u32 %v321, 4294901760
      %1126 = vmatmul.f32.gmra.mxu0 %v1125
      %v1127 = vpop.f32.mrf.mxu0
      %v1128 = vadd.f32 %v1031, %v1127
      %v1129 = vand.u32 %v322, 4294901760
      %1130 = vmatmul.f32.gmra.mxu0 %v1129
      %v1131 = vpop.f32.mrf.mxu0
      %v1132 = vadd.f32 %v1035, %v1131
      %v1133 = vand.u32 %v323, 4294901760
      %1134 = vmatmul.f32.gmra.mxu0 %v1133
      %v1135 = vpop.f32.mrf.mxu0
      %v1136 = vadd.f32 %v1039, %v1135
      %v1137 = vand.u32 %v324, 4294901760
      %1138 = vmatmul.f32.gmra.mxu0 %v1137
      %v1139 = vpop.f32.mrf.mxu0
      %v1140 = vadd.f32 %v1043, %v1139
      %v1141 = vand.u32 %v325, 4294901760
      %1142 = vmatmul.f32.gmra.mxu0 %v1141
      %v1143 = vpop.f32.mrf.mxu0
      %v1144 = vadd.f32 %v1047, %v1143
      %v1145 = vand.u32 %v326, 4294901760
      %1146 = vmatmul.f32.gmra.mxu0 %v1145
      %v1147 = vpop.f32.mrf.mxu0
      %v1148 = vadd.f32 %v1051, %v1147
      %v1149 = vand.u32 %v327, 4294901760
      %1150 = vmatmul.f32.gmra.mxu0 %v1149
      %v1151 = vpop.f32.mrf.mxu0
      %v1152 = vadd.f32 %v1055, %v1151
      %v1153 = vand.u32 %v328, 4294901760
      %1154 = vmatmul.f32.gmra.mxu0 %v1153
      %v1155 = vpop.f32.mrf.mxu0
      %v1156 = vadd.f32 %v1059, %v1155
      %v1157 = vand.u32 %v329, 4294901760
      %1158 = vmatmul.f32.gmra.mxu0 %v1157
      %v1159 = vpop.f32.mrf.mxu0
      %v1160 = vadd.f32 %v1063, %v1159
      %v1161 = vand.u32 %v330, 4294901760
      %1162 = vmatmul.f32.gmra.mxu0 %v1161
      %v1163 = vpop.f32.mrf.mxu0
      %v1164 = vadd.f32 %v1067, %v1163
      %v1165 = vand.u32 %v331, 4294901760
      %1166 = vmatmul.f32.gmra.mxu0 %v1165
      %v1167 = vpop.f32.mrf.mxu0
      %v1168 = vadd.f32 %v1071, %v1167
      %1169 = vdwg.mxu0
      %v1170 = vmul.f32 %v1108, %v348
      %v1171 = vmul.f32 %v1112, %v349
      %v1172 = vmul.f32 %v1116, %v350
      %v1173 = vmul.f32 %v1120, %v351
      %v1174 = vmul.f32 %v1124, %v352
      %v1175 = vmul.f32 %v1128, %v353
      %v1176 = vmul.f32 %v1132, %v354
      %v1177 = vmul.f32 %v1136, %v355
      %v1178 = vmul.f32 %v1140, %v356
      %v1179 = vmul.f32 %v1144, %v357
      %v1180 = vmul.f32 %v1148, %v358
      %v1181 = vmul.f32 %v1152, %v359
      %v1182 = vmul.f32 %v1156, %v360
      %v1183 = vmul.f32 %v1160, %v361
      %v1184 = vmul.f32 %v1164, %v362
      %v1185 = vmul.f32 %v1168, %v363
      %vm1186 = vcmask 80896
      %v1187 = vsel %vm1186, %v1170, 0.0
      %v1188 = vsel %vm1186, %v1171, 0.0
      %v1189 = vadd.f32 %v1187, %v1188
      %v1190 = vsel %vm1186, %v1172, 0.0
      %v1191 = vadd.f32 %v1189, %v1190
      %v1192 = vsel %vm1186, %v1173, 0.0
      %v1193 = vadd.f32 %v1191, %v1192
      %v1194 = vsel %vm1186, %v1174, 0.0
      %v1195 = vadd.f32 %v1193, %v1194
      %v1196 = vsel %vm1186, %v1175, 0.0
      %v1197 = vadd.f32 %v1195, %v1196
      %v1198 = vsel %vm1186, %v1176, 0.0
      %v1199 = vadd.f32 %v1197, %v1198
      %v1200 = vsel %vm1186, %v1177, 0.0
      %v1201 = vadd.f32 %v1199, %v1200
      %v1202 = vsel %vm1186, %v1178, 0.0
      %v1203 = vadd.f32 %v1201, %v1202
      %v1204 = vsel %vm1186, %v1179, 0.0
      %v1205 = vadd.f32 %v1203, %v1204
      %v1206 = vsel %vm1186, %v1180, 0.0
      %v1207 = vadd.f32 %v1205, %v1206
      %v1208 = vsel %vm1186, %v1181, 0.0
      %v1209 = vadd.f32 %v1207, %v1208
      %v1210 = vsel %vm1186, %v1182, 0.0
      %v1211 = vadd.f32 %v1209, %v1210
      %v1212 = vsel %vm1186, %v1183, 0.0
      %v1213 = vadd.f32 %v1211, %v1212
      %v1214 = vsel %vm1186, %v1184, 0.0
      %v1215 = vadd.f32 %v1213, %v1214
      %v1216 = vsel %vm1186, %v1185, 0.0
      %v1217 = vadd.f32 %v1215, %v1216
      %1218 = vadd.xlane.f32.xlu0 %v1217
      %v1219 = vpop.xlane.xlu0 %1218
      %v1220 = vrot.slane %v1219, 4
      %v1221 = vadd.f32 %v1219, %v1220
      %v1222 = vrot.slane %v1221, 2
      %v1223 = vadd.f32 %v1221, %v1222
      %v1224 = vrot.slane %v1223, 1
      %v1225 = vadd.f32 %v1223, %v1224
      %s1226 = vtos %v1225
      %v1227 = vld [vmem:[%s294] sm:$0xff]
      %v1228 = vstv %s1226
      %v1229 = vadd.f32 %v1227, %v1228
      %1230 = vst [vmem:[%s294] sm:$0xff] %v1229
      %p1231 = scmp.lt.s32.totalorder %s19, 1
      %s1232 = scalar_select %p1231, %s19, 1
      %p1233 = scmp.lt.s32.totalorder %s20, 0
      %s1234 = scalar_select %p1233, %s20, 0
      %s1235 = sadd.s32 %s1234, %s1232
      %s1236 = smul.addr %s1235, 8
      %s1237 = scalar_lea.vmem %s3, %s1236
      // Predicated region
      $region37: #{edge_loss.1} parent=31 // pred_check
        %p1238 = pneg %p139
      $region38: #{edge_loss.1} parent=31 // pred_check_branch
        %1240 = sbr.rel (%p1238) target = $region40
      $region39: #{edge_loss.1} parent=31 // pred_region
        _
      $region40: #{edge_loss.1} parent=31 // pred_fallthru
        _
    $region32: #{edge_loss.1} parent=5 // pred_fallthru
      _
    %p1241 = scmp.le.s32.totalorder 2, %s9
    // Predicated region
    $region41: #{edge_loss.1} parent=5 // pred_check
      %p1242 = pneg %p1241
    $region42: #{edge_loss.1} parent=5 // pred_check_branch
      %1244 = sbr.rel (%p1242) target = $region44
    $region43: #{edge_loss.1} parent=5 // pred_region
      %s1245 = ssub.s32 %s9, 2
      // Predicated region
      $region45: #{edge_loss.1} parent=43 // pred_check
        %p1246 = pneg %p145
      $region46: #{edge_loss.1} parent=43 // pred_check_branch
        %1248 = sbr.rel (%p1246) target = $region48
      $region47: #{edge_loss.1} parent=43 // pred_region
        %p1249 = scmp.lt.s32.totalorder %s22, 1
        %s1250 = scalar_select %p1249, %s22, 1
        %p1251 = scmp.lt.s32.totalorder %s23, 0
        %s1252 = scalar_select %p1251, %s23, 0
        %s1253 = sadd.s32 %s1252, %s1250
        %s1254 = smul.addr %s1253, 8
        %s1255 = scalar_lea.vmem %s3, %s1254
      $region48: #{edge_loss.1} parent=43 // pred_fallthru
        _
    $region44: #{edge_loss.1} parent=5 // pred_fallthru
      _
  $region6: #{edge_loss.1} parent=0 // loop_footer
    %s13 = sadd.s32 1, %s9
  $region7: #{edge_loss.1} parent=0 // loop_footer_branch
    %8 = sbr.rel target = $region3
  $region8: #{edge_loss.1} parent=0 // loop_exit
    _

</llo_original>
